<compile_context>
chip_gen: v5e
topology: v5e:2x2
jax: 0.10.0
libtpu: 0.0.40
codegen_flags: <defaults>
</compile_context>

<pallas_src>
import functools

import jax
import jax.numpy as jnp
from jax.experimental import pallas as pl
from jax.experimental.pallas import tpu as pltpu


def _round_up(v, m):
    return ((v + m - 1) // m) * m


# ------------------------------- kernel body ------------------------------- #

def mlp_kernel(x_ref, w1_ref, b1_ref, w2_ref, b2_ref, w3_ref, b3_ref,
               w4_ref, b4_ref, o_ref):
    # Four chained Linear layers.  Matmul operands are bf16 (MXU-native);
    # accumulation and the bias adds happen in f32.
    x = x_ref[...].astype(jnp.bfloat16)            # no-op if already bf16
    h = jnp.dot(x, w1_ref[...],
                preferred_element_type=jnp.float32) + b1_ref[...]
    h = jnp.dot(h.astype(jnp.bfloat16), w2_ref[...],
                preferred_element_type=jnp.float32) + b2_ref[...]
    h = jnp.dot(h.astype(jnp.bfloat16), w3_ref[...],
                preferred_element_type=jnp.float32) + b3_ref[...]
    o_ref[...] = (jnp.dot(h.astype(jnp.bfloat16), w4_ref[...],
                          preferred_element_type=jnp.float32)
                  + b4_ref[...]).astype(o_ref.dtype)


# --------------------------- one-time param prep --------------------------- #

def prepare_params(params):
    """Pad feature dims to multiples of 128 and cast weights to bf16 — ONCE.

    Call right after parameter creation; `mlp_forward` consumes the returned
    dict.  Doing this per-call would add four weight-sized HBM read+write
    passes in front of the kernel on every forward.
    """
    def pad_w(w):
        rows = _round_up(w.shape[0], 128)
        cols = _round_up(w.shape[1], 128)
        return jnp.pad(w, ((0, rows - w.shape[0]),
                           (0, cols - w.shape[1]))).astype(jnp.bfloat16)

    def pad_b(bv):
        bv = jnp.asarray(bv).reshape(1, -1)
        cols = _round_up(bv.shape[1], 128)
        return jnp.pad(bv, ((0, 0), (0, cols - bv.shape[1]))).astype(jnp.float32)

    prepared = {
        "w1": pad_w(params["w1"]), "b1": pad_b(params["b1"]),
        "w2": pad_w(params["w2"]), "b2": pad_b(params["b2"]),
        "w3": pad_w(params["w3"]), "b3": pad_b(params["b3"]),
        "w4": pad_w(params["w4"]), "b4": pad_b(params["b4"]),
    }
    dims = {"in_dim": int(params["w1"].shape[0]),
            "out_dim": int(params["w4"].shape[1])}
    return prepared, dims


# ------------------------- generation-aware choices ------------------------- #

def _device_defaults(batch):
    """Batch-tile default and VMEM budget, derived at Python level."""
    tile_b = 256
    try:
        kind = jax.devices()[0].device_kind.lower()
    except Exception:
        kind = ""
    if "v5 lite" in kind or "v5e" in kind:
        tile_b = 128                      # 4x128^2 MXU, single vst slot
    elif "v6" in kind and batch >= 2048:
        tile_b = 512                      # amortize per-step overhead; VMEM ample
    try:
        cap = int(pltpu.get_tpu_info().vmem_capacity_bytes)
    except Exception:
        cap = 64 * 1024 * 1024            # conservative (v7x-sized) fallback
    return tile_b, (cap * 3) // 4         # 25% headroom: ~48 MiB v7x, ~96 MiB v5e/v6e


def _pick_tile_b(b, tb_max):
    """16-aligned batch tile: minimize padded (wasted) rows, prefer >=2 grid
    steps (v7x 2-TC sharding), ties broken toward the largest tile."""
    tb_max = max(16, min(tb_max, _round_up(b, 16)))
    candidates = sorted({t for t in (16, 32, 64, 128, 256, 512)
                         if t <= tb_max} | {tb_max})

    def waste(t):
        return _round_up(b, t) - b

    multi = [t for t in candidates if _round_up(b, t) // t >= 2]
    pool = multi if multi else candidates
    best_w = min(waste(t) for t in pool)
    return max(t for t in pool if waste(t) == best_w)


_SINGLE_BUFFER_OK = None


def _single_buffer_supported():
    """Probe once whether pipeline_mode=pl.Buffered(1) lowers on this JAX/TPU."""
    global _SINGLE_BUFFER_OK
    if _SINGLE_BUFFER_OK is None:
        try:
            def probe(x_ref, o_ref):
                o_ref[...] = x_ref[...] + 1.0

            f = pl.pallas_call(
                probe,
                out_shape=jax.ShapeDtypeStruct((16, 128), jnp.float32),
                grid=(2,),
                in_specs=[pl.BlockSpec((8, 128), lambda i: (0, 0),
                                       pipeline_mode=pl.Buffered(1))],
                out_specs=pl.BlockSpec((8, 128), lambda i: (i, 0)),
            )
            jax.block_until_ready(f(jnp.zeros((8, 128), jnp.float32)))
            _SINGLE_BUFFER_OK = True
        except Exception:
            _SINGLE_BUFFER_OK = False
    return _SINGLE_BUFFER_OK


# --------------------------------- forward --------------------------------- #

@functools.partial(jax.jit,
                   static_argnames=("tb", "vmem_budget", "out_dim",
                                    "single_buffer"))
def _mlp_forward_jit(x, p, *, tb, vmem_budget, out_dim, single_buffer):
    b = x.shape[0]
    x2d = x.reshape(b, -1)                       # matches torch .reshape
    in_dim = x2d.shape[1]

    w1p, b1p = p["w1"], p["b1"]
    w2p, b2p = p["w2"], p["b2"]
    w3p, b3p = p["w3"], p["b3"]
    w4p, b4p = p["w4"], p["b4"]
    in_p, hid_p = w1p.shape
    out_p = w4p.shape[1]
    assert in_p == _round_up(in_dim, 128), "params not prepared for this input"

    b_p = _round_up(b, tb)
    if b_p == b and in_p == in_dim:
        xin = x2d                                # f32 straight through; kernel casts
    else:
        # single fused pad+cast pass (halves bytes written vs. padding in f32)
        xin = jnp.pad(x2d, ((0, b_p - b), (0, in_p - in_dim))).astype(jnp.bfloat16)

    resident = lambda i: (0, 0)
    if single_buffer:
        res_spec = lambda shape: pl.BlockSpec(shape, resident,
                                              pipeline_mode=pl.Buffered(1))
    else:
        res_spec = lambda shape: pl.BlockSpec(shape, resident)

    # Advisory scheduling hint for XLA around the custom call.
    flops = 2 * b_p * (in_p * hid_p + 2 * hid_p * hid_p + hid_p * out_p)
    bytes_accessed = (xin.size * xin.dtype.itemsize + b_p * out_p * 4
                      + (w1p.size + w2p.size + w3p.size + w4p.size) * 2
                      + (b1p.size + b2p.size + b3p.size + b4p.size) * 4)

    # VMEM budget: (single-buffered) resident weights/biases + double-buffered
    # x/out tiles + in-flight f32 intermediates, 2x headroom, capped at 75% of
    # physical VMEM (generation-aware).
    weight_bytes = ((w1p.size + w2p.size + w3p.size + w4p.size) * 2
                    + (b1p.size + b2p.size + b3p.size + b4p.size) * 4)
    if not single_buffer:
        weight_bytes *= 2
    act_bytes = (2 * tb * in_p * xin.dtype.itemsize + 2 * tb * out_p * 4
                 + 2 * tb * hid_p * 4)
    need = weight_bytes + act_bytes
    vmem_limit = int(min(max(2 * need, 16 * 1024 * 1024), vmem_budget))
    vmem_limit = max(vmem_limit, need + (1 << 20))

    out_padded = pl.pallas_call(
        mlp_kernel,
        out_shape=jax.ShapeDtypeStruct((b_p, out_p), jnp.float32),
        grid=(b_p // tb,),
        in_specs=[
            pl.BlockSpec((tb, in_p), lambda i: (i, 0)),
            res_spec((in_p, hid_p)), res_spec((1, hid_p)),
            res_spec((hid_p, hid_p)), res_spec((1, hid_p)),
            res_spec((hid_p, hid_p)), res_spec((1, hid_p)),
            res_spec((hid_p, out_p)), res_spec((1, out_p)),
        ],
        out_specs=pl.BlockSpec((tb, out_p), lambda i: (i, 0)),
        compiler_params=pltpu.CompilerParams(
            dimension_semantics=("parallel",),
            vmem_limit_bytes=vmem_limit),
        cost_estimate=pl.CostEstimate(
            flops=int(flops), transcendentals=0,
            bytes_accessed=int(bytes_accessed)),
    )(xin, w1p, b1p, w2p, b2p, w3p, b3p, w4p, b4p)

    # Slice padded batch rows / output lanes back to the logical shape.
    return out_padded[:b, :out_dim]


def mlp_forward(x, prepared_params, dims, tile_b=None):
    """x: (B, H, W) float32.  prepared_params/dims from prepare_params()."""
    b = x.shape[0]
    tb_default, vmem_budget = _device_defaults(b)
    tb = _pick_tile_b(b, tile_b if tile_b is not None else tb_default)
    return _mlp_forward_jit(x, prepared_params, tb=tb,
                            vmem_budget=int(vmem_budget),
                            out_dim=dims["out_dim"],
                            single_buffer=_single_buffer_supported())


# ------------------------------ init & reference --------------------------- #

def init_linear(key, in_features, out_features):
    """Mimics nn.Linear's uniform(-1/sqrt(in), 1/sqrt(in)) init.

    Weight is stored transposed vs. PyTorch, i.e. (in_features, out_features),
    so the kernel does plain `x @ W + b` matmuls on the MXU.
    """
    kw, kb = jax.random.split(key)
    bound = 1.0 / jnp.sqrt(jnp.float32(in_features))
    w = jax.random.uniform(kw, (in_features, out_features), jnp.float32,
                           minval=-bound, maxval=bound)
    bias = jax.random.uniform(kb, (1, out_features), jnp.float32,
                              minval=-bound, maxval=bound)
    return w, bias


def ref_forward(x2d, params):
    """Plain-JAX reference with the same bf16-operand / f32-accumulate math."""
    def lin(h, w, bias):
        return jnp.dot(h.astype(jnp.bfloat16), w.astype(jnp.bfloat16),
                       preferred_element_type=jnp.float32) + bias
    h = lin(x2d, params["w1"], params["b1"])
    h = lin(h, params["w2"], params["b2"])
    h = lin(h, params["w3"], params["b3"])
    return lin(h, params["w4"], params["b4"])


if __name__ == "__main__":
    # Small shapes consistent with the module: (batch, H, W) input flattened to
    # H*W features, then hidden -> hidden -> hidden -> output.
    batch = 2
    H = W = 16
    input_size = H * W          # analogue of 28*28
    hidden_size = 32            # analogue of 500
    output_size = 10

    key = jax.random.PRNGKey(0)
    kx, k1, k2, k3, k4 = jax.random.split(key, 5)

    x = jax.random.normal(kx, (batch, H, W), dtype=jnp.float32)

    w1, b1 = init_linear(k1, input_size, hidden_size)
    w2, b2 = init_linear(k2, hidden_size, hidden_size)
    w3, b3 = init_linear(k3, hidden_size, hidden_size)
    w4, b4 = init_linear(k4, hidden_size, output_size)
    params = dict(w1=w1, b1=b1, w2=w2, b2=b2, w3=w3, b3=b3, w4=w4, b4=b4)

    # One-time padding / bf16 cast of the parameters (kept across calls).
    prepared, dims = prepare_params(params)
    prepared = jax.block_until_ready(prepared)

    out = mlp_forward(x, prepared, dims)
    out = jax.block_until_ready(out)

    ref = ref_forward(x.reshape(batch, input_size), params)
    assert out.shape == (batch, output_size)
    assert jnp.allclose(out, ref, atol=2e-3, rtol=2e-3), (
        jnp.max(jnp.abs(out - ref)))

    print("KERNEL_OK")
</pallas_src>

<mosaic_0001>
module attributes {stable_mosaic.version = 11 : i64} {
  func.func @probe(%arg0: i32, %arg1: memref<8x128xf32, #tpu.memory_space<vmem>>, %arg2: memref<8x128xf32, #tpu.memory_space<vmem>>) attributes {dimension_semantics = [#tpu.dimension_semantics<arbitrary>], iteration_bounds = array<i64: 2>, scalar_prefetch = 0 : i64, scratch_operands = 0 : i64, tpu.core_type = #tpu.core_type<tc>, window_params = [{pipeline_mode = #tpu.pipeline_mode<synchronous>, transform_indices = @transform_0, window_bounds = array<i64: 8, 128>}, {transform_indices = @transform_1, window_bounds = array<i64: 8, 128>}]} {
    %c0 = arith.constant 0 : index
    %c0_0 = arith.constant 0 : index
    %0 = vector.load %arg1[%c0, %c0_0] : memref<8x128xf32, #tpu.memory_space<vmem>>, vector<8x128xf32>
    %cst = arith.constant 1.000000e+00 : f32
    %1 = vector.broadcast %cst : f32 to vector<8x128xf32>
    %2 = arith.addf %0, %1 : vector<8x128xf32>
    %c0_1 = arith.constant 0 : index
    %c0_2 = arith.constant 0 : index
    %3 = vector.load %arg2[%c0_1, %c0_2] : memref<8x128xf32, #tpu.memory_space<vmem>>, vector<8x128xf32>
    tpu.vector_store %arg2[%c0_1, %c0_2], %2 {strides = array<i32>} : memref<8x128xf32, #tpu.memory_space<vmem>>, vector<8x128xf32>,
    return
  }
  func.func @transform_0(%arg0: i32) -> (i32, i32) {
    %c0_i32 = arith.constant 0 : i32
    %c0_i32_0 = arith.constant 0 : i32
    %c0_i32_1 = arith.constant 0 : i32
    return %c0_i32, %c0_i32_0 : i32, i32
  }
  func.func @transform_1(%arg0: i32) -> (i32, i32) {
    %c0_i32 = arith.constant 0 : i32
    %c0_i32_0 = arith.constant 0 : i32
    return %arg0, %c0_i32 : i32, i32
  }
}

module attributes {stable_mosaic.version = 11 : i64} {
  func.func @mlp_kernel(%arg0: i32, %arg1: memref<16x256xbf16, #tpu.memory_space<vmem>>, %arg2: memref<256x128xbf16, #tpu.memory_space<vmem>>, %arg3: memref<1x128xf32, #tpu.memory_space<vmem>>, %arg4: memref<128x128xbf16, #tpu.memory_space<vmem>>, %arg5: memref<1x128xf32, #tpu.memory_space<vmem>>, %arg6: memref<128x128xbf16, #tpu.memory_space<vmem>>, %arg7: memref<1x128xf32, #tpu.memory_space<vmem>>, %arg8: memref<128x128xbf16, #tpu.memory_space<vmem>>, %arg9: memref<1x128xf32, #tpu.memory_space<vmem>>, %arg10: memref<16x128xf32, #tpu.memory_space<vmem>>) attributes {dimension_semantics = [#tpu.dimension_semantics<parallel>], iteration_bounds = array<i64: 1>, scalar_prefetch = 0 : i64, scratch_operands = 0 : i64, tpu.core_type = #tpu.core_type<tc>, window_params = [{transform_indices = @transform_0, window_bounds = array<i64: 16, 256>}, {pipeline_mode = #tpu.pipeline_mode<synchronous>, transform_indices = @transform_1, window_bounds = array<i64: 256, 128>}, {pipeline_mode = #tpu.pipeline_mode<synchronous>, transform_indices = @transform_2, window_bounds = array<i64: 1, 128>}, {pipeline_mode = #tpu.pipeline_mode<synchronous>, transform_indices = @transform_3, window_bounds = array<i64: 128, 128>}, {pipeline_mode = #tpu.pipeline_mode<synchronous>, transform_indices = @transform_4, window_bounds = array<i64: 1, 128>}, {pipeline_mode = #tpu.pipeline_mode<synchronous>, transform_indices = @transform_5, window_bounds = array<i64: 128, 128>}, {pipeline_mode = #tpu.pipeline_mode<synchronous>, transform_indices = @transform_6, window_bounds = array<i64: 1, 128>}, {pipeline_mode = #tpu.pipeline_mode<synchronous>, transform_indices = @transform_7, window_bounds = array<i64: 128, 128>}, {pipeline_mode = #tpu.pipeline_mode<synchronous>, transform_indices = @transform_8, window_bounds = array<i64: 1, 128>}, {transform_indices = @transform_9, window_bounds = array<i64: 16, 128>}]} {
    %c0 = arith.constant 0 : index
    %c0_0 = arith.constant 0 : index
    %0 = vector.load %arg1[%c0, %c0_0] : memref<16x256xbf16, #tpu.memory_space<vmem>>, vector<16x256xbf16>
    %c0_1 = arith.constant 0 : index
    %c0_2 = arith.constant 0 : index
    %1 = vector.load %arg2[%c0_1, %c0_2] : memref<256x128xbf16, #tpu.memory_space<vmem>>, vector<256x128xbf16>
    %cst = arith.constant dense<0.000000e+00> : vector<16x128xf32>
    %2 = tpu.matmul %0, %1, %cst {dimension_numbers = #tpu.dot_dimension_numbers<[1], [0], [0], [1], [0, 0, 1, 1], [], []>} : vector<16x256xbf16>, vector<256x128xbf16>, vector<16x128xf32> -> vector<16x128xf32>
    %c0_3 = arith.constant 0 : index
    %c0_4 = arith.constant 0 : index
    %3 = vector.load %arg3[%c0_3, %c0_4] : memref<1x128xf32, #tpu.memory_space<vmem>>, vector<1x128xf32>
    %4 = vector.broadcast %3 : vector<1x128xf32> to vector<16x128xf32>
    %5 = arith.addf %2, %4 : vector<16x128xf32>
    %6 = arith.truncf %5 : vector<16x128xf32> to vector<16x128xbf16>
    %c0_5 = arith.constant 0 : index
    %c0_6 = arith.constant 0 : index
    %7 = vector.load %arg4[%c0_5, %c0_6] : memref<128x128xbf16, #tpu.memory_space<vmem>>, vector<128x128xbf16>
    %cst_7 = arith.constant dense<0.000000e+00> : vector<16x128xf32>
    %8 = tpu.matmul %6, %7, %cst_7 {dimension_numbers = #tpu.dot_dimension_numbers<[1], [0], [0], [1], [0, 0, 1, 1], [], []>} : vector<16x128xbf16>, vector<128x128xbf16>, vector<16x128xf32> -> vector<16x128xf32>
    %c0_8 = arith.constant 0 : index
    %c0_9 = arith.constant 0 : index
    %9 = vector.load %arg5[%c0_8, %c0_9] : memref<1x128xf32, #tpu.memory_space<vmem>>, vector<1x128xf32>
    %10 = vector.broadcast %9 : vector<1x128xf32> to vector<16x128xf32>
    %11 = arith.addf %8, %10 : vector<16x128xf32>
    %12 = arith.truncf %11 : vector<16x128xf32> to vector<16x128xbf16>
    %c0_10 = arith.constant 0 : index
    %c0_11 = arith.constant 0 : index
    %13 = vector.load %arg6[%c0_10, %c0_11] : memref<128x128xbf16, #tpu.memory_space<vmem>>, vector<128x128xbf16>
    %cst_12 = arith.constant dense<0.000000e+00> : vector<16x128xf32>
    %14 = tpu.matmul %12, %13, %cst_12 {dimension_numbers = #tpu.dot_dimension_numbers<[1], [0], [0], [1], [0, 0, 1, 1], [], []>} : vector<16x128xbf16>, vector<128x128xbf16>, vector<16x128xf32> -> vector<16x128xf32>
    %c0_13 = arith.constant 0 : index
    %c0_14 = arith.constant 0 : index
    %15 = vector.load %arg7[%c0_13, %c0_14] : memref<1x128xf32, #tpu.memory_space<vmem>>, vector<1x128xf32>
    %16 = vector.broadcast %15 : vector<1x128xf32> to vector<16x128xf32>
    %17 = arith.addf %14, %16 : vector<16x128xf32>
    %18 = arith.truncf %17 : vector<16x128xf32> to vector<16x128xbf16>
    %c0_15 = arith.constant 0 : index
    %c0_16 = arith.constant 0 : index
    %19 = vector.load %arg8[%c0_15, %c0_16] : memref<128x128xbf16, #tpu.memory_space<vmem>>, vector<128x128xbf16>
    %cst_17 = arith.constant dense<0.000000e+00> : vector<16x128xf32>
    %20 = tpu.matmul %18, %19, %cst_17 {dimension_numbers = #tpu.dot_dimension_numbers<[1], [0], [0], [1], [0, 0, 1, 1], [], []>} : vector<16x128xbf16>, vector<128x128xbf16>, vector<16x128xf32> -> vector<16x128xf32>
    %c0_18 = arith.constant 0 : index
    %c0_19 = arith.constant 0 : index
    %21 = vector.load %arg9[%c0_18, %c0_19] : memref<1x128xf32, #tpu.memory_space<vmem>>, vector<1x128xf32>
    %22 = vector.broadcast %21 : vector<1x128xf32> to vector<16x128xf32>
    %23 = arith.addf %20, %22 : vector<16x128xf32>
    %c0_20 = arith.constant 0 : index
    %c0_21 = arith.constant 0 : index
    %24 = vector.load %arg10[%c0_20, %c0_21] : memref<16x128xf32, #tpu.memory_space<vmem>>, vector<16x128xf32>
    tpu.vector_store %arg10[%c0_20, %c0_21], %23 {strides = array<i32>} : memref<16x128xf32, #tpu.memory_space<vmem>>, vector<16x128xf32>,
    return
  }
  func.func @transform_0(%arg0: i32) -> (i32, i32) {
    %c0_i32 = arith.constant 0 : i32
    %c0_i32_0 = arith.constant 0 : i32
    return %arg0, %c0_i32 : i32, i32
  }
  func.func @transform_1(%arg0: i32) -> (i32, i32) {
    %c0_i32 = arith.constant 0 : i32
    %c0_i32_0 = arith.constant 0 : i32
    %c0_i32_1 = arith.constant 0 : i32
    return %c0_i32, %c0_i32_0 : i32, i32
  }
  func.func @transform_2(%arg0: i32) -> (i32, i32) {
    %c0_i32 = arith.constant 0 : i32
    %c0_i32_0 = arith.constant 0 : i32
    %c0_i32_1 = arith.constant 0 : i32
    return %c0_i32, %c0_i32_0 : i32, i32
  }
  func.func @transform_3(%arg0: i32) -> (i32, i32) {
    %c0_i32 = arith.constant 0 : i32
    %c0_i32_0 = arith.constant 0 : i32
    %c0_i32_1 = arith.constant 0 : i32
    return %c0_i32, %c0_i32_0 : i32, i32
  }
  func.func @transform_4(%arg0: i32) -> (i32, i32) {
    %c0_i32 = arith.constant 0 : i32
    %c0_i32_0 = arith.constant 0 : i32
    %c0_i32_1 = arith.constant 0 : i32
    return %c0_i32, %c0_i32_0 : i32, i32
  }
  func.func @transform_5(%arg0: i32) -> (i32, i32) {
    %c0_i32 = arith.constant 0 : i32
    %c0_i32_0 = arith.constant 0 : i32
    %c0_i32_1 = arith.constant 0 : i32
    return %c0_i32, %c0_i32_0 : i32, i32
  }
  func.func @transform_6(%arg0: i32) -> (i32, i32) {
    %c0_i32 = arith.constant 0 : i32
    %c0_i32_0 = arith.constant 0 : i32
    %c0_i32_1 = arith.constant 0 : i32
    return %c0_i32, %c0_i32_0 : i32, i32
  }
  func.func @transform_7(%arg0: i32) -> (i32, i32) {
    %c0_i32 = arith.constant 0 : i32
    %c0_i32_0 = arith.constant 0 : i32
    %c0_i32_1 = arith.constant 0 : i32
    return %c0_i32, %c0_i32_0 : i32, i32
  }
  func.func @transform_8(%arg0: i32) -> (i32, i32) {
    %c0_i32 = arith.constant 0 : i32
    %c0_i32_0 = arith.constant 0 : i32
    %c0_i32_1 = arith.constant 0 : i32
    return %c0_i32, %c0_i32_0 : i32, i32
  }
  func.func @transform_9(%arg0: i32) -> (i32, i32) {
    %c0_i32 = arith.constant 0 : i32
    %c0_i32_0 = arith.constant 0 : i32
    return %arg0, %c0_i32 : i32, i32
  }
}

</mosaic_0001>

<llo_original>
// kernel: tpu_custom_call.1
$region0: #{tpu_custom_call.1}
  #allocation0 [shape = 'u32[]', space=smem, size = 0x4, offset = 0x4, fixed_abs, tag = 'smem constant byte address 0x4 - core index']
  #allocation1 [shape = 'u32[72,128]{1,0:T(1,128)}', space=vmem, size = 0x9000, scoped, tag = 'internal scratch']
  %s0 = inlined_call_operand.hbm [shape: f32[8,128], index: 0, kind: input, shape index: {}]
  %s1 = inlined_call_operand.hbm [shape: f32[16,128], index: 1, kind: output, shape index: {}]
  %s2 = sld [smem:[#allocation0]]
  $region41: #{tpu_custom_call.1} parent=0
    _
  %s4 = ssub.s32 1, %s2
  %s5 = scalar_select 0, %s4, %s2
  $region1: #{tpu_custom_call.1} parent=0
    #allocation2 [shape = 'u8[4096]{0}', space=vmem, size = 0x1000, scoped, tag = 'input window, operand 0, single buffered']
    #allocation3 [shape = 's32[2]{0}', space=sflag, size = 0x8, scoped, tag = 'scoped memory for tpu_custom_call.1']
    #allocation4 [shape = 's32[2]{0}', space=sflag, size = 0x8, scoped, tag = 'scoped memory for tpu_custom_call.1']
    #allocation5 [shape = 'u8[8192]{0}', space=vmem, size = 0x2000, scoped, tag = 'output window, operand 0']
    %6 = vsyncpa [#allocation3], 0
    %7 = vsyncpa [#allocation4], 0
    %s8 = scalar_lea.sflag [#allocation4], 1
    %9 = vsyncpa %s8, 0
    loop: start=0, step=1, limit=4
    $region2: #{tpu_custom_call.1} parent=1 // loop_pre_header
      _
    $region3: #{tpu_custom_call.1} parent=1 // loop_header
      %s11 = sphi 0, %s15
      %p12 = scmp.ge.s32.totalorder %s11, 4
      %s19 = sphi 0, %s19
      %s21 = sphi 0, %s19
      %s22 = sphi 0, %s21
      %s36 = sphi 0, %s22
      %s42 = sphi 0, %s44
      %s45 = sphi 0, %s42
      %s46 = sphi 0, %s45
      %s62 = sphi 0, %s46
    $region4: #{tpu_custom_call.1} parent=1 // loop_header_branch
      %14 = sbr.rel (%p12) target = $region8
    $region5: #{tpu_custom_call.1} parent=1 // loop_body
      %s16 = ssub.s32 %s11, 1
      %s17 = ssub.s32 %s11, 2
      %s18 = sadd.s32 %s11, 1
      %s20 = sadd.s32 %s19, 1
      %p23 = scmp.eq.s32.totalorder %s11, 1
      %p24 = scmp.ne.s32.totalorder %s19, %s21
      %p25 = scmp.eq.s32.totalorder %s11, 0
      %p26 = por %p24, %p25
      %p27 = scmp.ne.s32.totalorder %s19, %s21
      %p28 = scmp.eq.s32.totalorder %s16, 1
      %p29 = por %p27, %p28
      %p30 = scmp.ne.s32.totalorder %s21, %s22
      %p31 = scmp.eq.s32.totalorder %s16, 0
      %p32 = por %p30, %p31
      %p33 = scmp.ne.s32.totalorder %s21, %s22
      %p34 = scmp.eq.s32.totalorder %s17, 1
      %p35 = por %p33, %p34
      %p37 = scmp.ne.s32.totalorder %s22, %s36
      %p38 = scmp.eq.s32.totalorder %s17, 0
      %p39 = por %p37, %p38
      %s40 = ssub.s32 %s11, %s18
      %p41 = scmp.eq.s32.totalorder %s40, 0
      %s43 = sadd.s32 %s42, 1
      %s44 = scalar_select %p41, %s42, %s43
      %p47 = pneg %p41
      %p48 = scmp.eq.s32.totalorder %s11, 1
      %p49 = por %p47, %p48
      %p50 = scmp.ne.s32.totalorder %s42, %s45
      %p51 = scmp.eq.s32.totalorder %s11, 0
      %p52 = por %p50, %p51
      %p53 = scmp.ne.s32.totalorder %s42, %s45
      %p54 = scmp.eq.s32.totalorder %s16, 1
      %p55 = por %p53, %p54
      %p56 = scmp.ne.s32.totalorder %s45, %s46
      %p57 = scmp.eq.s32.totalorder %s16, 0
      %p58 = por %p56, %p57
      %p59 = scmp.ne.s32.totalorder %s45, %s46
      %p60 = scmp.eq.s32.totalorder %s17, 1
      %p61 = por %p59, %p60
      %p63 = scmp.ne.s32.totalorder %s46, %s62
      %p64 = scmp.eq.s32.totalorder %s17, 0
      %p65 = por %p63, %p64
      %p66 = scmp.le.s32.totalorder 1, %s11
      %p67 = scmp.lt.s32.totalorder %s11, 3
      %p68 = pnand %p66, %p67
      %p69 = pneg %p68
      // Predicated region
      $region9: #{tpu_custom_call.1} parent=5 // pred_check
        _
      $region10: #{tpu_custom_call.1} parent=5 // pred_check_branch
        %71 = sbr.rel (%p68) target = $region12
      $region11: #{tpu_custom_call.1} parent=5 // pred_region
        %s72 = ssub.s32 %s11, 1
        // Predicated region
        $region13: #{tpu_custom_call.1} parent=11 // pred_check
          %p73 = pneg %p32
        $region14: #{tpu_custom_call.1} parent=11 // pred_check_branch
          %75 = sbr.rel (%p73) target = $region16
        $region15: #{tpu_custom_call.1} parent=11 // pred_region
          %77 = vsyncadd [#allocation3], 0
          %s79 = sshll.u32 %s0, 4
          %s80 = int_to_ptr.hbm [resolvable:$true] %s79
          %s81 = sshll.u32 [#allocation2], 4
          %s82 = int_to_ptr.vmem [resolvable:$true] %s81
          %84 = dma.hbm_to_vmem [thread:$0]  %s80, 128, %s82, [#allocation3]
        $region16: #{tpu_custom_call.1} parent=11 // pred_fallthru
          _
      $region12: #{tpu_custom_call.1} parent=5 // pred_fallthru
        _
      %p85 = scmp.lt.s32.totalorder %s11, 2
      // Predicated region
      $region17: #{tpu_custom_call.1} parent=5 // pred_check
        %p86 = pneg %p85
      $region18: #{tpu_custom_call.1} parent=5 // pred_check_branch
        %88 = sbr.rel (%p86) target = $region20
      $region19: #{tpu_custom_call.1} parent=5 // pred_region
        _
      $region20: #{tpu_custom_call.1} parent=5 // pred_fallthru
        _
      %p89 = scmp.le.s32.totalorder 1, %s11
      %p90 = scmp.lt.s32.totalorder %s11, 3
      %p91 = pnand %p89, %p90
      %p92 = pneg %p91
      // Predicated region
      $region21: #{tpu_custom_call.1} parent=5 // pred_check
        _
      $region22: #{tpu_custom_call.1} parent=5 // pred_check_branch
        %94 = sbr.rel (%p91) target = $region24
      $region23: #{tpu_custom_call.1} parent=5 // pred_region
        %s95 = ssub.s32 %s11, 1
        // Predicated region
        $region25: #{tpu_custom_call.1} parent=23 // pred_check
          %p96 = pneg %p32
        $region26: #{tpu_custom_call.1} parent=23 // pred_check_branch
          %98 = sbr.rel (%p96) target = $region28
        $region27: #{tpu_custom_call.1} parent=23 // pred_region
          %100 = dma.done [#allocation3], 128
        $region28: #{tpu_custom_call.1} parent=23 // pred_fallthru
          _
        %p101 = pneg %p32
        %p102 = pneg %p29
        %p103 = pneg %p58
        %p104 = pneg %p55
        %s105 = sand.u32 %s45, 1
        %s106 = scalar_lea.sflag [#allocation4], %s105
        %s107 = sand.u32 %s45, 1
        %s108 = smul.addr %s107, 8
        %s109 = scalar_lea.vmem [#allocation5], %s108
        %v110 = vld [vmem:[#allocation2] sm:$0xff]
        %v111 = vadd.f32 %v110, 1.0
        %112 = vst [vmem:[%s109] sm:$0xff] %v111
        %s113 = sand.u32 %s45, 1
        %s114 = scalar_lea.sflag [#allocation4], %s113
        %s115 = sand.u32 %s45, 1
        %s116 = smul.addr %s115, 8
        %s117 = scalar_lea.vmem [#allocation5], %s116
        // Predicated region
        $region29: #{tpu_custom_call.1} parent=23 // pred_check
          %p118 = pneg %p55
        $region30: #{tpu_custom_call.1} parent=23 // pred_check_branch
          %120 = sbr.rel (%p118) target = $region32
        $region31: #{tpu_custom_call.1} parent=23 // pred_region
          %122 = vsyncadd %s114, 0
          %s123 = smul.addr %s16, 8
          %s124 = scalar_lea.hbm %s1, %s123
          %s126 = sshll.u32 %s117, 4
          %s127 = int_to_ptr.vmem [resolvable:$true] %s126
          %s128 = sshll.u32 %s124, 4
          %s129 = int_to_ptr.hbm [resolvable:$true] %s128
          %131 = dma.vmem_to_hbm [thread:$0]  %s127, 128, %s129, %s114
        $region32: #{tpu_custom_call.1} parent=23 // pred_fallthru
          _
      $region24: #{tpu_custom_call.1} parent=5 // pred_fallthru
        _
      %p132 = scmp.le.s32.totalorder 2, %s11
      // Predicated region
      $region33: #{tpu_custom_call.1} parent=5 // pred_check
        %p133 = pneg %p132
      $region34: #{tpu_custom_call.1} parent=5 // pred_check_branch
        %135 = sbr.rel (%p133) target = $region36
      $region35: #{tpu_custom_call.1} parent=5 // pred_region
        %s136 = ssub.s32 %s11, 2
        // Predicated region
        $region37: #{tpu_custom_call.1} parent=35 // pred_check
          %p137 = pneg %p61
        $region38: #{tpu_custom_call.1} parent=35 // pred_check_branch
          %139 = sbr.rel (%p137) target = $region40
        $region39: #{tpu_custom_call.1} parent=35 // pred_region
          %s140 = sand.u32 %s46, 1
          %s141 = scalar_lea.sflag [#allocation4], %s140
          %s142 = sand.u32 %s46, 1
          %s143 = smul.addr %s142, 8
          %s144 = scalar_lea.vmem [#allocation5], %s143
          %146 = dma.done %s141, 128
        $region40: #{tpu_custom_call.1} parent=35 // pred_fallthru
          _
      $region36: #{tpu_custom_call.1} parent=5 // pred_fallthru
        _
    $region6: #{tpu_custom_call.1} parent=1 // loop_footer
      %s15 = sadd.s32 1, %s11
    $region7: #{tpu_custom_call.1} parent=1 // loop_footer_branch
      %10 = sbr.rel target = $region3
    $region8: #{tpu_custom_call.1} parent=1 // loop_exit
      _
    %147 = vsyncpa [#allocation3], 1
    %s148 = scalar_lea.sflag [#allocation3], 1
    %149 = vsyncpa %s148, 1
    %150 = vsyncpa [#allocation4], 1
    %s151 = scalar_lea.sflag [#allocation4], 1
    %152 = vsyncpa %s151, 1

// kernel: _mlp_forward_jit.1
$region0: #{_mlp_forward_jit.1}
  #allocation0 [shape = 'u32[]', space=smem, size = 0x4, offset = 0x4, fixed_abs, tag = 'smem constant byte address 0x4 - core index']
  #allocation1 [shape = 'u32[72,128]{1,0:T(1,128)}', space=vmem, size = 0x9000, scoped, tag = 'internal scratch']
  %s0 = inlined_call_operand.vmem [shape: bf16[16,256], index: 0, kind: input, shape index: {}]
  %s1 = inlined_call_operand.hbm [shape: bf16[256,128], index: 1, kind: input, shape index: {}]
  %s2 = inlined_call_operand.vmem [shape: f32[1,128], index: 2, kind: input, shape index: {}]
  %s3 = inlined_call_operand.vmem [shape: bf16[128,128], index: 3, kind: input, shape index: {}]
  %s4 = inlined_call_operand.vmem [shape: f32[1,128], index: 4, kind: input, shape index: {}]
  %s5 = inlined_call_operand.hbm [shape: bf16[128,128], index: 5, kind: input, shape index: {}]
  %s6 = inlined_call_operand.vmem [shape: f32[1,128], index: 6, kind: input, shape index: {}]
  %s7 = inlined_call_operand.hbm [shape: bf16[128,128], index: 7, kind: input, shape index: {}]
  %s8 = inlined_call_operand.vmem [shape: f32[1,128], index: 8, kind: input, shape index: {}]
  %s9 = inlined_call_operand.vmem [shape: f32[16,128], index: 9, kind: output, shape index: {}]
  %s10 = sld [smem:[#allocation0]]
  $region58: #{_mlp_forward_jit.1} parent=0
    _
  %s12 = ssub.s32 1, %s10
  %s13 = scalar_select 0, %s12, %s10
  $region1: #{_mlp_forward_jit.1} parent=0
    #allocation2 [shape = 'u8[65536]{0}', space=vmem, size = 0x10000, scoped, tag = 'input window, operand 1, single buffered']
    #allocation3 [shape = 's32[1]{0}', space=sflag, size = 0x4, scoped, tag = 'scoped memory for _mlp_forward_jit.1']
    #allocation4 [shape = 'u8[32768]{0}', space=vmem, size = 0x8000, scoped, tag = 'input window, operand 5, single buffered']
    #allocation5 [shape = 's32[1]{0}', space=sflag, size = 0x4, scoped, tag = 'scoped memory for _mlp_forward_jit.1']
    #allocation6 [shape = 'u8[32768]{0}', space=vmem, size = 0x8000, scoped, tag = 'input window, operand 7, single buffered']
    %14 = vsyncpa [#allocation3], 0
    %15 = vsyncpa [#allocation5], 0
    // Predicated region
    $region2: #{_mlp_forward_jit.1} parent=1 // pred_check
      _
    $region3: #{_mlp_forward_jit.1} parent=1 // pred_check_branch
      %17 = sbr.rel (0) target = $region5
    $region4: #{_mlp_forward_jit.1} parent=1 // pred_region
      _
    $region5: #{_mlp_forward_jit.1} parent=1 // pred_fallthru
      _
    // Predicated region
    $region6: #{_mlp_forward_jit.1} parent=1 // pred_check
      _
    $region7: #{_mlp_forward_jit.1} parent=1 // pred_check_branch
      %19 = sbr.rel (0) target = $region9
    $region8: #{_mlp_forward_jit.1} parent=1 // pred_region
      %21 = vsyncadd [#allocation3], 0
      %s22 = sshll.u32 %s1, 4
      %s23 = int_to_ptr.hbm [resolvable:$true] %s22
      %s24 = sshll.u32 [#allocation2], 4
      %s25 = int_to_ptr.vmem [resolvable:$true] %s24
      %30 = dma.hbm_to_vmem [thread:$0]  %s23, 2048, %s25, [#allocation3], 64, 64, 4
    $region9: #{_mlp_forward_jit.1} parent=1 // pred_fallthru
      _
    // Predicated region
    $region10: #{_mlp_forward_jit.1} parent=1 // pred_check
      _
    $region11: #{_mlp_forward_jit.1} parent=1 // pred_check_branch
      %32 = sbr.rel (0) target = $region13
    $region12: #{_mlp_forward_jit.1} parent=1 // pred_region
      _
    $region13: #{_mlp_forward_jit.1} parent=1 // pred_fallthru
      _
    // Predicated region
    $region14: #{_mlp_forward_jit.1} parent=1 // pred_check
      _
    $region15: #{_mlp_forward_jit.1} parent=1 // pred_check_branch
      %34 = sbr.rel (0) target = $region17
    $region16: #{_mlp_forward_jit.1} parent=1 // pred_region
      _
    $region17: #{_mlp_forward_jit.1} parent=1 // pred_fallthru
      _
    // Predicated region
    $region18: #{_mlp_forward_jit.1} parent=1 // pred_check
      _
    $region19: #{_mlp_forward_jit.1} parent=1 // pred_check_branch
      %36 = sbr.rel (0) target = $region21
    $region20: #{_mlp_forward_jit.1} parent=1 // pred_region
      _
    $region21: #{_mlp_forward_jit.1} parent=1 // pred_fallthru
      _
    // Predicated region
    $region22: #{_mlp_forward_jit.1} parent=1 // pred_check
      _
    $region23: #{_mlp_forward_jit.1} parent=1 // pred_check_branch
      %38 = sbr.rel (0) target = $region25
    $region24: #{_mlp_forward_jit.1} parent=1 // pred_region
      %40 = vsyncadd [#allocation5], 0
      %s41 = sshll.u32 %s5, 4
      %s42 = int_to_ptr.hbm [resolvable:$true] %s41
      %s43 = sshll.u32 [#allocation4], 4
      %s44 = int_to_ptr.vmem [resolvable:$true] %s43
      %49 = dma.hbm_to_vmem [thread:$0]  %s42, 1024, %s44, [#allocation5], 64, 64, 4
    $region25: #{_mlp_forward_jit.1} parent=1 // pred_fallthru
      _
    // Predicated region
    $region26: #{_mlp_forward_jit.1} parent=1 // pred_check
      _
    $region27: #{_mlp_forward_jit.1} parent=1 // pred_check_branch
      %51 = sbr.rel (0) target = $region29
    $region28: #{_mlp_forward_jit.1} parent=1 // pred_region
      _
    $region29: #{_mlp_forward_jit.1} parent=1 // pred_fallthru
      _
    // Predicated region
    $region30: #{_mlp_forward_jit.1} parent=1 // pred_check
      _
    $region31: #{_mlp_forward_jit.1} parent=1 // pred_check_branch
      %53 = sbr.rel (0) target = $region33
    $region32: #{_mlp_forward_jit.1} parent=1 // pred_region
      %55 = vsyncadd [#allocation5], 0
      %s56 = sshll.u32 %s7, 4
      %s57 = int_to_ptr.hbm [resolvable:$true] %s56
      %s58 = sshll.u32 [#allocation6], 4
      %s59 = int_to_ptr.vmem [resolvable:$true] %s58
      %64 = dma.hbm_to_vmem [thread:$0]  %s57, 1024, %s59, [#allocation5], 64, 64, 4
    $region33: #{_mlp_forward_jit.1} parent=1 // pred_fallthru
      _
    // Predicated region
    $region34: #{_mlp_forward_jit.1} parent=1 // pred_check
      _
    $region35: #{_mlp_forward_jit.1} parent=1 // pred_check_branch
      %66 = sbr.rel (0) target = $region37
    $region36: #{_mlp_forward_jit.1} parent=1 // pred_region
      _
    $region37: #{_mlp_forward_jit.1} parent=1 // pred_fallthru
      _
    // Predicated region
    $region38: #{_mlp_forward_jit.1} parent=1 // pred_check
      _
    $region39: #{_mlp_forward_jit.1} parent=1 // pred_check_branch
      %68 = sbr.rel (0) target = $region41
    $region40: #{_mlp_forward_jit.1} parent=1 // pred_region
      %70 = dma.done [#allocation3], 2048
    $region41: #{_mlp_forward_jit.1} parent=1 // pred_fallthru
      _
    // Predicated region
    $region42: #{_mlp_forward_jit.1} parent=1 // pred_check
      _
    $region43: #{_mlp_forward_jit.1} parent=1 // pred_check_branch
      %72 = sbr.rel (0) target = $region45
    $region44: #{_mlp_forward_jit.1} parent=1 // pred_region
      %74 = dma.done [#allocation5], 1024
    $region45: #{_mlp_forward_jit.1} parent=1 // pred_fallthru
      _
    // Predicated region
    $region46: #{_mlp_forward_jit.1} parent=1 // pred_check
      _
    $region47: #{_mlp_forward_jit.1} parent=1 // pred_check_branch
      %76 = sbr.rel (0) target = $region49
    $region48: #{_mlp_forward_jit.1} parent=1 // pred_region
      %78 = dma.done [#allocation5], 1024
    $region49: #{_mlp_forward_jit.1} parent=1 // pred_fallthru
      _
    %v79 = vld [vmem:[%s0] sm:$0xff]
    %v80 = vld [vmem:[%s0 + $0x8] sm:$0xff]
    %v81 = vld [vmem:[#allocation2] sm:$0xf]
    %v82 = vld [vmem:[#allocation2 + $0x4] sm:$0xf]
    %v83 = vld [vmem:[#allocation2 + $0x8] sm:$0xf]
    %v84 = vld [vmem:[#allocation2 + $0xc] sm:$0xf]
    %v85 = vld [vmem:[#allocation2 + $0x10] sm:$0xf]
    %v86 = vld [vmem:[#allocation2 + $0x14] sm:$0xf]
    %v87 = vld [vmem:[#allocation2 + $0x18] sm:$0xf]
    %v88 = vld [vmem:[#allocation2 + $0x1c] sm:$0xf]
    %v89 = vld [vmem:[#allocation2 + $0x20] sm:$0xf]
    %v90 = vld [vmem:[#allocation2 + $0x24] sm:$0xf]
    %v91 = vld [vmem:[#allocation2 + $0x28] sm:$0xf]
    %v92 = vld [vmem:[#allocation2 + $0x2c] sm:$0xf]
    %v93 = vld [vmem:[#allocation2 + $0x30] sm:$0xf]
    %v94 = vld [vmem:[#allocation2 + $0x34] sm:$0xf]
    %v95 = vld [vmem:[#allocation2 + $0x38] sm:$0xf]
    %v96 = vld [vmem:[#allocation2 + $0x3c] sm:$0xf]
    %v97 = vld [vmem:[#allocation2 + $0x40] sm:$0xf]
    %v98 = vld [vmem:[#allocation2 + $0x44] sm:$0xf]
    %v99 = vld [vmem:[#allocation2 + $0x48] sm:$0xf]
    %v100 = vld [vmem:[#allocation2 + $0x4c] sm:$0xf]
    %v101 = vld [vmem:[#allocation2 + $0x50] sm:$0xf]
    %v102 = vld [vmem:[#allocation2 + $0x54] sm:$0xf]
    %v103 = vld [vmem:[#allocation2 + $0x58] sm:$0xf]
    %v104 = vld [vmem:[#allocation2 + $0x5c] sm:$0xf]
    %v105 = vld [vmem:[#allocation2 + $0x60] sm:$0xf]
    %v106 = vld [vmem:[#allocation2 + $0x64] sm:$0xf]
    %v107 = vld [vmem:[#allocation2 + $0x68] sm:$0xf]
    %v108 = vld [vmem:[#allocation2 + $0x6c] sm:$0xf]
    %v109 = vld [vmem:[#allocation2 + $0x70] sm:$0xf]
    %v110 = vld [vmem:[#allocation2 + $0x74] sm:$0xf]
    %v111 = vld [vmem:[#allocation2 + $0x78] sm:$0xf]
    %v112 = vld [vmem:[#allocation2 + $0x7c] sm:$0xf]
    %v113 = vld [vmem:[%s2] sm:$0x1]
    %v115 = vperm.slane %v113, 0
    %v119 = vunpack.c.l.b16 %v79
    %v120 = vunpack.c.h.b16 %v79
    %v121 = vunpack.c.l.b16 %v80
    %v122 = vunpack.c.h.b16 %v80
    %v123 = vpack.c.b16 %v121, %v119
    %v124 = vpack.c.b16 %v122, %v120
    %v159 = vunpack.c.l.b16 %v81
    %v160 = vunpack.c.l.b16 %v82
    %v161 = vunpack.c.l.b16 %v83
    %v162 = vunpack.c.l.b16 %v84
    %v163 = vunpack.c.l.b16 %v85
    %v164 = vunpack.c.l.b16 %v86
    %v165 = vunpack.c.l.b16 %v87
    %v166 = vunpack.c.l.b16 %v88
    %v167 = vunpack.c.l.b16 %v89
    %v168 = vunpack.c.l.b16 %v90
    %v169 = vunpack.c.l.b16 %v91
    %v170 = vunpack.c.l.b16 %v92
    %v171 = vunpack.c.l.b16 %v93
    %v172 = vunpack.c.l.b16 %v94
    %v173 = vunpack.c.l.b16 %v95
    %v174 = vunpack.c.l.b16 %v96
    %v175 = vunpack.c.l.b16 %v97
    %v176 = vunpack.c.l.b16 %v98
    %v177 = vunpack.c.l.b16 %v99
    %v178 = vunpack.c.l.b16 %v100
    %v179 = vunpack.c.l.b16 %v101
    %v180 = vunpack.c.l.b16 %v102
    %v181 = vunpack.c.l.b16 %v103
    %v182 = vunpack.c.l.b16 %v104
    %v183 = vunpack.c.l.b16 %v105
    %v184 = vunpack.c.l.b16 %v106
    %v185 = vunpack.c.l.b16 %v107
    %v186 = vunpack.c.l.b16 %v108
    %v187 = vunpack.c.l.b16 %v109
    %v188 = vunpack.c.l.b16 %v110
    %v189 = vunpack.c.l.b16 %v111
    %v190 = vunpack.c.l.b16 %v112
    %v191 = vpack.c.b16 %v160, %v159
    %v192 = vpack.c.b16 %v162, %v161
    %v193 = vpack.c.b16 %v164, %v163
    %v194 = vpack.c.b16 %v166, %v165
    %v195 = vpack.c.b16 %v168, %v167
    %v196 = vpack.c.b16 %v170, %v169
    %v197 = vpack.c.b16 %v172, %v171
    %v198 = vpack.c.b16 %v174, %v173
    %v199 = vpack.c.b16 %v176, %v175
    %v200 = vpack.c.b16 %v178, %v177
    %v201 = vpack.c.b16 %v180, %v179
    %v202 = vpack.c.b16 %v182, %v181
    %v203 = vpack.c.b16 %v184, %v183
    %v204 = vpack.c.b16 %v186, %v185
    %v205 = vpack.c.b16 %v188, %v187
    %v206 = vpack.c.b16 %v190, %v189
    %223 = vmatpush.bf16.msra.mxu0 %v198
    %224 = vmatpush.bf16.msra.mxu0 %v197
    %225 = vmatpush.bf16.msra.mxu0 %v196
    %226 = vmatpush.bf16.msra.mxu0 %v195
    %227 = vmatpush.bf16.msra.mxu0 %v194
    %228 = vmatpush.bf16.msra.mxu0 %v193
    %229 = vmatpush.bf16.msra.mxu0 %v192
    %230 = vmatpush.bf16.msra.mxu0 %v191
    %231 = vmatmul.bf16.gmra.mxu0 %v123
    %v232 = vpop.f32.mrf.mxu0
    %v233 = vadd.f32 %v115, %v232
    %v234 = vpop.f32.mrf.mxu0
    %v235 = vadd.f32 %v115, %v234
    %236 = vdwg.mxu0
    %237 = vmatpush.bf16.msra.mxu0 %v206
    %238 = vmatpush.bf16.msra.mxu0 %v205
    %239 = vmatpush.bf16.msra.mxu0 %v204
    %240 = vmatpush.bf16.msra.mxu0 %v203
    %241 = vmatpush.bf16.msra.mxu0 %v202
    %242 = vmatpush.bf16.msra.mxu0 %v201
    %243 = vmatpush.bf16.msra.mxu0 %v200
    %244 = vmatpush.bf16.msra.mxu0 %v199
    %245 = vmatmul.bf16.gmra.mxu0 %v124
    %v246 = vpop.f32.mrf.mxu0
    %v247 = vadd.f32 %v233, %v246
    %v248 = vpop.f32.mrf.mxu0
    %v249 = vadd.f32 %v235, %v248
    %250 = vdwg.mxu0
    %v251 = vpack.c.bf16 %v249, %v247
    %v252 = vld [vmem:[%s3] sm:$0xf]
    %v253 = vld [vmem:[%s3 + $0x4] sm:$0xf]
    %v254 = vld [vmem:[%s3 + $0x8] sm:$0xf]
    %v255 = vld [vmem:[%s3 + $0xc] sm:$0xf]
    %v256 = vld [vmem:[%s3 + $0x10] sm:$0xf]
    %v257 = vld [vmem:[%s3 + $0x14] sm:$0xf]
    %v258 = vld [vmem:[%s3 + $0x18] sm:$0xf]
    %v259 = vld [vmem:[%s3 + $0x1c] sm:$0xf]
    %v260 = vld [vmem:[%s3 + $0x20] sm:$0xf]
    %v261 = vld [vmem:[%s3 + $0x24] sm:$0xf]
    %v262 = vld [vmem:[%s3 + $0x28] sm:$0xf]
    %v263 = vld [vmem:[%s3 + $0x2c] sm:$0xf]
    %v264 = vld [vmem:[%s3 + $0x30] sm:$0xf]
    %v265 = vld [vmem:[%s3 + $0x34] sm:$0xf]
    %v266 = vld [vmem:[%s3 + $0x38] sm:$0xf]
    %v267 = vld [vmem:[%s3 + $0x3c] sm:$0xf]
    %v268 = vld [vmem:[%s4] sm:$0x1]
    %v270 = vperm.slane %v268, 0
    %v288 = vunpack.c.l.b16 %v252
    %v289 = vunpack.c.l.b16 %v253
    %v290 = vunpack.c.l.b16 %v254
    %v291 = vunpack.c.l.b16 %v255
    %v292 = vunpack.c.l.b16 %v256
    %v293 = vunpack.c.l.b16 %v257
    %v294 = vunpack.c.l.b16 %v258
    %v295 = vunpack.c.l.b16 %v259
    %v296 = vunpack.c.l.b16 %v260
    %v297 = vunpack.c.l.b16 %v261
    %v298 = vunpack.c.l.b16 %v262
    %v299 = vunpack.c.l.b16 %v263
    %v300 = vunpack.c.l.b16 %v264
    %v301 = vunpack.c.l.b16 %v265
    %v302 = vunpack.c.l.b16 %v266
    %v303 = vunpack.c.l.b16 %v267
    %v304 = vpack.c.b16 %v289, %v288
    %v305 = vpack.c.b16 %v291, %v290
    %v306 = vpack.c.b16 %v293, %v292
    %v307 = vpack.c.b16 %v295, %v294
    %v308 = vpack.c.b16 %v297, %v296
    %v309 = vpack.c.b16 %v299, %v298
    %v310 = vpack.c.b16 %v301, %v300
    %v311 = vpack.c.b16 %v303, %v302
    %320 = vmatpush.bf16.msra.mxu0 %v311
    %321 = vmatpush.bf16.msra.mxu0 %v310
    %322 = vmatpush.bf16.msra.mxu0 %v309
    %323 = vmatpush.bf16.msra.mxu0 %v308
    %324 = vmatpush.bf16.msra.mxu0 %v307
    %325 = vmatpush.bf16.msra.mxu0 %v306
    %326 = vmatpush.bf16.msra.mxu0 %v305
    %327 = vmatpush.bf16.msra.mxu0 %v304
    %328 = vmatmul.bf16.gmra.mxu0 %v251
    %v329 = vpop.f32.mrf.mxu0
    %v330 = vadd.f32 %v270, %v329
    %v331 = vpop.f32.mrf.mxu0
    %v332 = vadd.f32 %v270, %v331
    %333 = vdwg.mxu0
    %v334 = vpack.c.bf16 %v332, %v330
    %v335 = vld [vmem:[#allocation4] sm:$0xf]
    %v336 = vld [vmem:[#allocation4 + $0x4] sm:$0xf]
    %v337 = vld [vmem:[#allocation4 + $0x8] sm:$0xf]
    %v338 = vld [vmem:[#allocation4 + $0xc] sm:$0xf]
    %v339 = vld [vmem:[#allocation4 + $0x10] sm:$0xf]
    %v340 = vld [vmem:[#allocation4 + $0x14] sm:$0xf]
    %v341 = vld [vmem:[#allocation4 + $0x18] sm:$0xf]
    %v342 = vld [vmem:[#allocation4 + $0x1c] sm:$0xf]
    %v343 = vld [vmem:[#allocation4 + $0x20] sm:$0xf]
    %v344 = vld [vmem:[#allocation4 + $0x24] sm:$0xf]
    %v345 = vld [vmem:[#allocation4 + $0x28] sm:$0xf]
    %v346 = vld [vmem:[#allocation4 + $0x2c] sm:$0xf]
    %v347 = vld [vmem:[#allocation4 + $0x30] sm:$0xf]
    %v348 = vld [vmem:[#allocation4 + $0x34] sm:$0xf]
    %v349 = vld [vmem:[#allocation4 + $0x38] sm:$0xf]
    %v350 = vld [vmem:[#allocation4 + $0x3c] sm:$0xf]
    %v351 = vld [vmem:[%s6] sm:$0x1]
    %v353 = vperm.slane %v351, 0
    %v371 = vunpack.c.l.b16 %v335
    %v372 = vunpack.c.l.b16 %v336
    %v373 = vunpack.c.l.b16 %v337
    %v374 = vunpack.c.l.b16 %v338
    %v375 = vunpack.c.l.b16 %v339
    %v376 = vunpack.c.l.b16 %v340
    %v377 = vunpack.c.l.b16 %v341
    %v378 = vunpack.c.l.b16 %v342
    %v379 = vunpack.c.l.b16 %v343
    %v380 = vunpack.c.l.b16 %v344
    %v381 = vunpack.c.l.b16 %v345
    %v382 = vunpack.c.l.b16 %v346
    %v383 = vunpack.c.l.b16 %v347
    %v384 = vunpack.c.l.b16 %v348
    %v385 = vunpack.c.l.b16 %v349
    %v386 = vunpack.c.l.b16 %v350
    %v387 = vpack.c.b16 %v372, %v371
    %v388 = vpack.c.b16 %v374, %v373
    %v389 = vpack.c.b16 %v376, %v375
    %v390 = vpack.c.b16 %v378, %v377
    %v391 = vpack.c.b16 %v380, %v379
    %v392 = vpack.c.b16 %v382, %v381
    %v393 = vpack.c.b16 %v384, %v383
    %v394 = vpack.c.b16 %v386, %v385
    %403 = vmatpush.bf16.msra.mxu0 %v394
    %404 = vmatpush.bf16.msra.mxu0 %v393
    %405 = vmatpush.bf16.msra.mxu0 %v392
    %406 = vmatpush.bf16.msra.mxu0 %v391
    %407 = vmatpush.bf16.msra.mxu0 %v390
    %408 = vmatpush.bf16.msra.mxu0 %v389
    %409 = vmatpush.bf16.msra.mxu0 %v388
    %410 = vmatpush.bf16.msra.mxu0 %v387
    %411 = vmatmul.bf16.gmra.mxu0 %v334
    %v412 = vpop.f32.mrf.mxu0
    %v413 = vadd.f32 %v353, %v412
    %v414 = vpop.f32.mrf.mxu0
    %v415 = vadd.f32 %v353, %v414
    %416 = vdwg.mxu0
    %v417 = vpack.c.bf16 %v415, %v413
    %v418 = vld [vmem:[#allocation6] sm:$0xf]
    %v419 = vld [vmem:[#allocation6 + $0x4] sm:$0xf]
    %v420 = vld [vmem:[#allocation6 + $0x8] sm:$0xf]
    %v421 = vld [vmem:[#allocation6 + $0xc] sm:$0xf]
    %v422 = vld [vmem:[#allocation6 + $0x10] sm:$0xf]
    %v423 = vld [vmem:[#allocation6 + $0x14] sm:$0xf]
    %v424 = vld [vmem:[#allocation6 + $0x18] sm:$0xf]
    %v425 = vld [vmem:[#allocation6 + $0x1c] sm:$0xf]
    %v426 = vld [vmem:[#allocation6 + $0x20] sm:$0xf]
    %v427 = vld [vmem:[#allocation6 + $0x24] sm:$0xf]
    %v428 = vld [vmem:[#allocation6 + $0x28] sm:$0xf]
    %v429 = vld [vmem:[#allocation6 + $0x2c] sm:$0xf]
    %v430 = vld [vmem:[#allocation6 + $0x30] sm:$0xf]
    %v431 = vld [vmem:[#allocation6 + $0x34] sm:$0xf]
    %v432 = vld [vmem:[#allocation6 + $0x38] sm:$0xf]
    %v433 = vld [vmem:[#allocation6 + $0x3c] sm:$0xf]
    %v434 = vld [vmem:[%s8] sm:$0x1]
    %v436 = vperm.slane %v434, 0
    %v454 = vunpack.c.l.b16 %v418
    %v455 = vunpack.c.l.b16 %v419
    %v456 = vunpack.c.l.b16 %v420
    %v457 = vunpack.c.l.b16 %v421
    %v458 = vunpack.c.l.b16 %v422
    %v459 = vunpack.c.l.b16 %v423
    %v460 = vunpack.c.l.b16 %v424
    %v461 = vunpack.c.l.b16 %v425
    %v462 = vunpack.c.l.b16 %v426
    %v463 = vunpack.c.l.b16 %v427
    %v464 = vunpack.c.l.b16 %v428
    %v465 = vunpack.c.l.b16 %v429
    %v466 = vunpack.c.l.b16 %v430
    %v467 = vunpack.c.l.b16 %v431
    %v468 = vunpack.c.l.b16 %v432
    %v469 = vunpack.c.l.b16 %v433
    %v470 = vpack.c.b16 %v455, %v454
    %v471 = vpack.c.b16 %v457, %v456
    %v472 = vpack.c.b16 %v459, %v458
    %v473 = vpack.c.b16 %v461, %v460
    %v474 = vpack.c.b16 %v463, %v462
    %v475 = vpack.c.b16 %v465, %v464
    %v476 = vpack.c.b16 %v467, %v466
    %v477 = vpack.c.b16 %v469, %v468
    %486 = vmatpush.bf16.msra.mxu0 %v477
    %487 = vmatpush.bf16.msra.mxu0 %v476
    %488 = vmatpush.bf16.msra.mxu0 %v475
    %489 = vmatpush.bf16.msra.mxu0 %v474
    %490 = vmatpush.bf16.msra.mxu0 %v473
    %491 = vmatpush.bf16.msra.mxu0 %v472
    %492 = vmatpush.bf16.msra.mxu0 %v471
    %493 = vmatpush.bf16.msra.mxu0 %v470
    %494 = vmatmul.bf16.gmra.mxu0 %v417
    %v495 = vpop.f32.mrf.mxu0
    %v496 = vadd.f32 %v436, %v495
    %v497 = vpop.f32.mrf.mxu0
    %v498 = vadd.f32 %v436, %v497
    %499 = vdwg.mxu0
    %500 = vst [vmem:[%s9] sm:$0xff] %v496
    %501 = vst [vmem:[%s9 + $0x8] sm:$0xff] %v498
    // Predicated region
    $region50: #{_mlp_forward_jit.1} parent=1 // pred_check
      _
    $region51: #{_mlp_forward_jit.1} parent=1 // pred_check_branch
      %503 = sbr.rel (0) target = $region53
    $region52: #{_mlp_forward_jit.1} parent=1 // pred_region
      _
    $region53: #{_mlp_forward_jit.1} parent=1 // pred_fallthru
      _
    // Predicated region
    $region54: #{_mlp_forward_jit.1} parent=1 // pred_check
      _
    $region55: #{_mlp_forward_jit.1} parent=1 // pred_check_branch
      %505 = sbr.rel (0) target = $region57
    $region56: #{_mlp_forward_jit.1} parent=1 // pred_region
      _
    $region57: #{_mlp_forward_jit.1} parent=1 // pred_fallthru
      _
    %506 = vsyncpa [#allocation3], 1
    %507 = vsyncpa [#allocation5], 1

</llo_original>
